<compile_context>
chip_gen: v7x
topology: tpu7x:2x2x1
jax: 0.10.0
libtpu: 0.0.40
codegen_flags: <defaults>
</compile_context>

<pallas_src>
import functools

import numpy as np
import jax
import jax.numpy as jnp
from jax import lax
from jax.experimental import pallas as pl
from jax.experimental.pallas import tpu as pltpu


def _round_up(x, m):
    return ((x + m - 1) // m) * m


def _parametrization_kernel(params_ref, out_ref, *, boundary, free_inds,
                            lbounds, ubounds, defaults):
    """params_ref: (K, Bt) free params; out_ref: (N, Bt) full params."""
    K, bt = params_ref.shape
    N = out_ref.shape[0]
    p = params_ref[...].astype(jnp.float32)                     # (K, Bt)

    if boundary in ("clipping", "reflecting"):
        # Per-row constant columns built from *scalar* literals via traced ops so
        # nothing non-scalar is captured by the kernel (Pallas rejects array consts).
        row_ids = lax.broadcasted_iota(jnp.int32, (K, 1), 0)

        def col(vals):
            v = jnp.zeros((K, 1), jnp.float32)
            for i, x in enumerate(vals):
                v = jnp.where(row_ids == i, jnp.float32(x), v)
            return v

        lb_h = [float(l) for l in lbounds]
        ub_h = [float(u) for u in ubounds]

    if boundary == "clipping":
        eps = 1e-6
        c = col([0.5 * (l + u) for l, u in zip(lb_h, ub_h)])
        r = col([0.5 * (u - l) for l, u in zip(lb_h, ub_h)])
        inv_r = col([1.0 / (0.5 * (u - l)) for l, u in zip(lb_h, ub_h)])
        z = (p - c) * inv_r                                     # VPU only, no divide
        z = jnp.clip(z, -1.0 + eps, 1.0 - eps)                  # F.hardtanh(-1+eps, 1-eps)
        p = r * z + c
    elif boundary == "reflecting":
        lb = col(lb_h)
        width = col([u - l for l, u in zip(lb_h, ub_h)])
        inv_w = col([1.0 / (u - l) for l, u in zip(lb_h, ub_h)])
        ub = lb + width
        cond_l = p < lb
        cond_r = p >= ub
        u = (p - lb) * inv_w
        # One exp per element; selected argument is always <= 1 on valid lanes so exp
        # never overflows (no inf*0 NaN hazard of the mask-multiply formulation).
        arg = jnp.where(cond_l, u, 1.0 - u)
        e = jnp.exp(arg)
        u = jnp.where(cond_l, 1.0 - e, jnp.where(cond_r, e, u))
        p = lb + width * u
    elif boundary == "none":
        pass
    # Unknown / 'absorbing' boundaries are rejected at trace time in the wrapper.

    p = p.astype(out_ref.dtype)

    # _set_fixed_params: assemble the full (N, Bt) tile once and do a single dense
    # store (no per-row masked vst). Consecutive free output rows map to consecutive
    # rows of p (free_inds is sorted), so they are taken as multi-row slices.
    free_pos = {int(j): i for i, j in enumerate(free_inds)}
    pieces = []
    j = 0
    while j < N:
        if j in free_pos:
            j1 = j
            while (j1 + 1) < N and (j1 + 1) in free_pos:
                j1 += 1
            pieces.append(p[free_pos[j]:free_pos[j1] + 1, :])
            j = j1 + 1
        else:
            pieces.append(jnp.full((1, bt), float(defaults[j]), out_ref.dtype))
            j += 1
    tile = pieces[0] if len(pieces) == 1 else jnp.concatenate(pieces, axis=0)
    out_ref[...] = tile


def parametrization_forward(params_t, *, bounds, params_default, free_inds,
                            boundary="clipping", block_b=None):
    """Lane-dense forward.

    params_t : (K, B) free parameters (batch on the lane axis).
    Returns  : (N, B) full parameter vectors (transposed w.r.t. the torch layout).
    """
    if boundary not in ("none", "clipping", "reflecting"):
        # TODO(synk): 'absorbing' boundary needs uniform RNG (torch.rand_like); would
        # require pltpu.prng_seed / stateful_uniform with an explicit seed argument.
        raise ValueError(f"Unsupported boundary: {boundary!r}")

    bounds = np.asarray(bounds, dtype=np.float32)
    lbounds = tuple(float(x) for x in bounds[:, 0])
    ubounds = tuple(float(x) for x in bounds[:, 1])
    if boundary != "none" and any(u <= l for l, u in zip(lbounds, ubounds)):
        raise ValueError("Degenerate bounds (ub <= lb) with a boundary transform.")

    K, B = params_t.shape
    N = len(params_default)
    assert K == len(free_inds) and K > 0

    if block_b is None:
        # Memory-bound kernel: make tiles big. 32768 lanes keeps double-buffered
        # (K+N) rows + temporaries at a few MiB (well inside v7x's 64 MiB VMEM) and
        # still yields >=2 blocks for large batches so both v7x TCs are used.
        cap = 32768
        if B <= 1024:
            block_b = _round_up(B, 128)                 # single-block fast path
        else:
            block_b = min(cap, _round_up(pl.cdiv(B, 2), 128))
    assert block_b % 128 == 0, "batch tile must be a multiple of 128 lanes"
    n_blocks = pl.cdiv(B, block_b)
    # No jnp.pad / trailing slice: Pallas handles the ragged last block (OOB lanes of
    # the input block are ignored by the math; OOB output lanes are masked off).

    kernel = functools.partial(
        _parametrization_kernel,
        boundary=boundary,
        free_inds=tuple(int(i) for i in free_inds),
        lbounds=lbounds,
        ubounds=ubounds,
        defaults=tuple(float(x) for x in params_default),
    )

    itemsize = int(jnp.dtype(params_t.dtype).itemsize)
    flops_per = {"none": 0, "clipping": 5, "reflecting": 11}[boundary]
    cost = pl.CostEstimate(
        flops=int(flops_per * K * B),
        transcendentals=int(K * B) if boundary == "reflecting" else 0,
        bytes_accessed=int((K + N) * B * itemsize),
    )

    out = pl.pallas_call(
        kernel,
        out_shape=jax.ShapeDtypeStruct((N, B), params_t.dtype),
        grid=(n_blocks,),
        # TODO(synk): on v7x, pipeline_mode=pl.Buffered(3) on these specs can help if
        # profiling shows exposed DMA-issue latency at very large block_b.
        in_specs=[pl.BlockSpec((K, block_b), lambda b: (0, b))],
        out_specs=pl.BlockSpec((N, block_b), lambda b: (0, b)),
        compiler_params=pltpu.CompilerParams(
            dimension_semantics=("parallel",),
            vmem_limit_bytes=32 * 1024 * 1024,
        ),
        cost_estimate=cost,
    )(params_t)

    return out


if __name__ == "__main__":
    # --- deterministic "enabled" Parametrization state (synthetic, in-script) ---
    n_params = 6                           # total parameters
    fixed = {1: 1.5, 4: -0.3}              # fixed_params -> params_default entries
    free_inds = [0, 2, 3, 5]               # free parameter columns
    K = len(free_inds)                     # input_size = 4

    params_default = np.zeros(n_params, dtype=np.float32)
    for idx, val in fixed.items():
        params_default[idx] = val

    # default bounds of the free parameters: rows of (min, max)
    bounds = np.array([[-1.0, 1.0],
                       [ 0.0, 3.0],
                       [-2.0, 2.0],
                       [ 0.5, 2.5]], dtype=np.float32)
    lb_j = jnp.asarray(bounds[:, 0])
    ub_j = jnp.asarray(bounds[:, 1])
    centre = 0.5 * (ub_j + lb_j)
    radius = 0.5 * (ub_j - lb_j)

    key = jax.random.PRNGKey(0)
    # batch=300 exercises the single ragged block; batch=2000 exercises a 2-block
    # grid with a ragged last block.
    for batch in (300, 2000):
        bkey = jax.random.fold_in(key, batch)
        params_bk = jax.random.uniform(bkey, (batch, K), dtype=jnp.float32,
                                       minval=-3.0, maxval=4.0)   # torch layout (B, K)
        params_kb = params_bk.T                                   # lane-dense (K, B)

        for boundary in ("none", "clipping", "reflecting"):
            out_kb = parametrization_forward(params_kb,
                                             bounds=bounds,
                                             params_default=params_default,
                                             free_inds=free_inds,
                                             boundary=boundary)
            out = jax.block_until_ready(out_kb).T                 # back to (B, N)

            # --- pure-JAX reference (torch semantics, torch layout) ---
            if boundary == "none":
                p_t = params_bk
            elif boundary == "clipping":
                eps = 1e-6
                z = jnp.clip((params_bk - centre) / radius, -1.0 + eps, 1.0 - eps)
                p_t = radius * z + centre
            else:  # reflecting
                cond_l = params_bk < lb_j
                cond_r = params_bk >= ub_j
                u = (params_bk - lb_j) / (ub_j - lb_j)
                u = ((1.0 - jnp.exp(u)) * cond_l
                     + u * (~cond_l & ~cond_r)
                     + jnp.exp(1.0 - u) * cond_r)
                p_t = lb_j + (ub_j - lb_j) * u
            ref = jnp.tile(jnp.asarray(params_default)[None, :], (batch, 1))
            ref = ref.at[:, jnp.asarray(free_inds)].set(p_t)
            np.testing.assert_allclose(np.asarray(out), np.asarray(ref),
                                       rtol=1e-5, atol=1e-5)

    print("KERNEL_OK")
</pallas_src>

<mosaic_0001>
module attributes {stable_mosaic.version = 11 : i64} {
  func.func @_parametrization_kernel(%arg0: i32, %arg1: memref<4x384xf32, #tpu.memory_space<vmem>>, %arg2: memref<6x384xf32, #tpu.memory_space<vmem>>) attributes {dimension_semantics = [#tpu.dimension_semantics<parallel>], iteration_bounds = array<i64: 1>, scalar_prefetch = 0 : i64, scratch_operands = 0 : i64, tpu.core_type = #tpu.core_type<tc>, window_params = [{transform_indices = @transform_0, window_bounds = array<i64: 4, 384>}, {transform_indices = @transform_1, window_bounds = array<i64: 6, 384>}]} {
    %c0 = arith.constant 0 : index
    %c0_0 = arith.constant 0 : index
    %0 = vector.load %arg1[%c0, %c0_0] : memref<4x384xf32, #tpu.memory_space<vmem>>, vector<4x384xf32>
    %1 = vector.extract_strided_slice %0 {offsets = [0, 0], sizes = [1, 384], strides = [1, 1]} : vector<4x384xf32> to vector<1x384xf32>
    %cst = arith.constant 1.500000e+00 : f32
    %2 = vector.broadcast %cst : f32 to vector<1x384xf32>
    %3 = vector.extract_strided_slice %0 {offsets = [1, 0], sizes = [2, 384], strides = [1, 1]} : vector<4x384xf32> to vector<2x384xf32>
    %cst_1 = arith.constant -3.000000e-01 : f32
    %4 = vector.broadcast %cst_1 : f32 to vector<1x384xf32>
    %5 = vector.extract_strided_slice %0 {offsets = [3, 0], sizes = [1, 384], strides = [1, 1]} : vector<4x384xf32> to vector<1x384xf32>
    %6 = tpu.concatenate %1, %2, %3, %4, %5 in 0 : vector<1x384xf32>, vector<1x384xf32>, vector<2x384xf32>, vector<1x384xf32>, vector<1x384xf32> -> vector<6x384xf32>
    %c0_2 = arith.constant 0 : index
    %c0_3 = arith.constant 0 : index
    %7 = vector.load %arg2[%c0_2, %c0_3] : memref<6x384xf32, #tpu.memory_space<vmem>>, vector<6x384xf32>
    tpu.vector_store %arg2[%c0_2, %c0_3], %6 {strides = array<i32>} : memref<6x384xf32, #tpu.memory_space<vmem>>, vector<6x384xf32>,
    return
  }
  func.func @transform_0(%arg0: i32) -> (i32, i32) {
    %c0_i32 = arith.constant 0 : i32
    %c0_i32_0 = arith.constant 0 : i32
    return %c0_i32, %arg0 : i32, i32
  }
  func.func @transform_1(%arg0: i32) -> (i32, i32) {
    %c0_i32 = arith.constant 0 : i32
    %c0_i32_0 = arith.constant 0 : i32
    return %c0_i32, %arg0 : i32, i32
  }
}

</mosaic_0001>

<llo_original>
// kernel: tpu_custom_call.1
$region0: #{tpu_custom_call.1}
  #allocation0 [shape = 'u32[]', space=smem, size = 0x4, offset = 0x4, fixed_abs, tag = 'smem constant byte address 0x4 - core index']
  #allocation1 [shape = 'u32[144,128]{1,0:T(1,128)}', space=vmem, size = 0x12000, scoped, tag = 'internal scratch']
  %s0 = inlined_call_operand.hbm [shape: f32[4,300], index: 0, kind: input, shape index: {}]
  %s1 = inlined_call_operand.hbm [shape: f32[6,300], index: 1, kind: output, shape index: {}]
  %s2 = sld [smem:[#allocation0]]
  $region18: #{tpu_custom_call.1} parent=0
    _
  %s4 = ssub.s32 1, %s2
  %s5 = scalar_select 0, %s4, %s2
  $region1: #{tpu_custom_call.1} parent=0
    #allocation2 [shape = 'u8[6144]{0}', space=vmem, size = 0x1800, scoped, tag = 'input window, operand 0, single buffered']
    #allocation3 [shape = 's32[1]{0}', space=sflag, size = 0x4, scoped, tag = 'scoped memory for tpu_custom_call.1']
    #allocation4 [shape = 's32[1]{0}', space=sflag, size = 0x4, scoped, tag = 'scoped memory for tpu_custom_call.1']
    #allocation5 [shape = 'u8[12288]{0}', space=vmem, size = 0x3000, scoped, tag = 'output window, operand 0, single buffered']
    %6 = vsyncpa [#allocation3], 0
    %7 = vsyncpa [#allocation4], 0
    // Predicated region
    $region2: #{tpu_custom_call.1} parent=1 // pred_check
      _
    $region3: #{tpu_custom_call.1} parent=1 // pred_check_branch
      %9 = sbr.rel (0) target = $region5
    $region4: #{tpu_custom_call.1} parent=1 // pred_region
      %s11 = ssub.s32 192, 192
      %12 = vsyncadd [#allocation3], %s11
      %s14 = sshll.u32 [#allocation2], 4
      %s15 = int_to_ptr.vmem [resolvable:$true] %s14
      %17 = dma.hbm_to_vmem [thread:$0]  %s0, 192, %s15, [#allocation3]
    $region5: #{tpu_custom_call.1} parent=1 // pred_fallthru
      _
    // Predicated region
    $region6: #{tpu_custom_call.1} parent=1 // pred_check
      _
    $region7: #{tpu_custom_call.1} parent=1 // pred_check_branch
      %19 = sbr.rel (0) target = $region9
    $region8: #{tpu_custom_call.1} parent=1 // pred_region
      %20 = dma.done [#allocation3], 192
    $region9: #{tpu_custom_call.1} parent=1 // pred_fallthru
      _
    %v21 = vld [vmem:[#allocation2] sm:$0xff]
    %v22 = vld [vmem:[#allocation2 + $0x8] sm:$0xf]
    %v25 = vlaneseq
    %v26 = vshrl.u32 %v25, 7
    %v27 = vsub.s32 0, %v26
    %v28 = vrot.slane %v21, %v27
    %v29 = vlaneseq
    %v30 = vshrl.u32 %v29, 7
    %v31 = vsub.s32 4, %v30
    %v32 = vrot.slane %v21, %v31
    %v33 = vlaneseq
    %v34 = vshrl.u32 %v33, 7
    %v35 = vsub.s32 0, %v34
    %v36 = vrot.slane %v22, %v35
    %v40 = vcombine.high %v21, %v21
    %v41 = vrot.slane %v21, 7
    %v42 = vrot.slane %v40, 7
    %v43 = vrot.slane %v22, 7
    %v47 = vlaneseq
    %v48 = vshrl.u32 %v47, 7
    %v49 = vsub.s32 3, %v48
    %v50 = vrot.slane %v21, %v49
    %v51 = vlaneseq
    %v52 = vshrl.u32 %v51, 7
    %v53 = vsub.s32 7, %v52
    %v54 = vrot.slane %v21, %v53
    %v55 = vlaneseq
    %v56 = vshrl.u32 %v55, 7
    %v57 = vsub.s32 3, %v56
    %v58 = vrot.slane %v22, %v57
    %vm62 = vcmask 1040384
    %v63 = vsel %vm62, %v28, 1.5
    %v64 = vsel %vm62, %v32, 1.5
    %v65 = vsel %vm62, %v36, 1.5
    %vm66 = vcmask 1041408
    %v67 = vsel %vm66, %v63, %v41
    %v68 = vsel %vm66, %v64, %v42
    %v69 = vsel %vm66, %v65, %v43
    %vm70 = vcmask 1043456
    %v71 = vsel %vm70, %v67, -0.3
    %v72 = vsel %vm70, %v68, -0.3
    %v73 = vsel %vm70, %v69, -0.3
    %vm74 = vcmask 1044480
    %v75 = vsel %vm74, %v71, %v50
    %v76 = vsel %vm74, %v72, %v54
    %v77 = vsel %vm74, %v73, %v58
    %78 = vst [vmem:[#allocation5] sm:$0x3f] %v75
    %79 = vst [vmem:[#allocation5 + $0x8] sm:$0x3f] %v76
    %80 = vst [vmem:[#allocation5 + $0x10] sm:$0x3f] %v77
    // Predicated region
    $region10: #{tpu_custom_call.1} parent=1 // pred_check
      _
    $region11: #{tpu_custom_call.1} parent=1 // pred_check_branch
      %82 = sbr.rel (0) target = $region13
    $region12: #{tpu_custom_call.1} parent=1 // pred_region
      %s84 = ssub.s32 384, 384
      %85 = vsyncadd [#allocation4], %s84
      %s87 = sshll.u32 [#allocation5], 4
      %s88 = int_to_ptr.vmem [resolvable:$true] %s87
      %90 = dma.vmem_to_hbm [thread:$0]  %s88, 384, %s1, [#allocation4]
    $region13: #{tpu_custom_call.1} parent=1 // pred_fallthru
      _
    // Predicated region
    $region14: #{tpu_custom_call.1} parent=1 // pred_check
      _
    $region15: #{tpu_custom_call.1} parent=1 // pred_check_branch
      %92 = sbr.rel (0) target = $region17
    $region16: #{tpu_custom_call.1} parent=1 // pred_region
      %93 = dma.done [#allocation4], 384
    $region17: #{tpu_custom_call.1} parent=1 // pred_fallthru
      _
    %94 = vsyncpa [#allocation3], 1
    %95 = vsyncpa [#allocation4], 1

</llo_original>
